<compile_context>
chip_gen: v7x
topology: tpu7x:2x2x1
jax: 0.10.0
libtpu: 0.0.40
codegen_flags: <defaults>
</compile_context>

<pallas_src>
import functools

import jax
import jax.numpy as jnp
from jax.experimental import pallas as pl
from jax.experimental.pallas import tpu as pltpu


# ----------------------------------------------------------------------------
# Tile selection / VMEM budgeting helpers
# ----------------------------------------------------------------------------
_W2_DOUBLE_BUFFER_BUDGET = 8 * 1024 * 1024     # bytes; safe on v5e/v6e/v7x


def _pick_out_tile(n_embd, budget_bytes=_W2_DOUBLE_BUFFER_BUDGET):
    """Largest tn (multiple of 128, dividing n_embd) whose double-buffered
    bf16 (n_embd, tn) tile fits in `budget_bytes`. Falls back to n_embd when
    n_embd is small or has no 128-multiple divisor (full-extent blocks are
    always layout-legal; the VMEM limit is raised accordingly)."""
    if n_embd <= 128:
        return n_embd
    cap = (budget_bytes // (4 * n_embd)) // 128 * 128   # 2 bufs * 2 B/elt
    cap = max(cap, 128)
    if n_embd <= cap:
        return n_embd
    for t in range(cap, 127, -128):
        if n_embd % t == 0:
            return t
    # Guard: no 128-multiple divisor (odd n_embd). Full-slab block; the caller
    # raises vmem_limit_bytes to cover it.
    return n_embd


def _vmem_limit(buffer_bytes, headroom=2 * 1024 * 1024, floor=16 * 1024 * 1024):
    return int(max(buffer_bytes + headroom, floor))


def _pad_rows(P):
    """Pad prefix rows to a multiple of 16 (bf16 packs (16,128) per vreg)."""
    return max(16, ((P + 15) // 16) * 16)


# ----------------------------------------------------------------------------
# Kernel 1: h = tanh(emb @ W1 + b1)
#   Grid axis 0: tiles of width tn1 over W1's output columns.
#   emb stays resident (constant index map); W1/b1 tiles stream (double-buffered).
# ----------------------------------------------------------------------------
def _prefix_h_kernel(emb_ref,     # VMEM (P_pad, E)    bf16 (resident)
                     w1_ref,      # VMEM (E, tn1)      bf16 (streamed tile)
                     b1_ref,      # VMEM (1, tn1)      bf16 (streamed tile)
                     h_ref):      # VMEM (P_pad, tn1)  bf16
    h = jnp.dot(emb_ref[...], w1_ref[...], preferred_element_type=jnp.float32)
    h = h + b1_ref[...].astype(jnp.float32)
    h_ref[...] = jnp.tanh(h).astype(h_ref.dtype)


# ----------------------------------------------------------------------------
# Kernel 2: per-(slab, out-tile) linear  y = h @ W2_tile + b2_tile
#   Grid axis 0: 2*L slabs (one (layer, key|value) slab of width n_embd)
#   Grid axis 1: tiles of width tn inside a slab
#   h resident (constant index map); W2 tiles stream contiguously from HBM;
#   b2 is fully resident and sliced in-kernel by program_id.
# ----------------------------------------------------------------------------
def _prefix_w2_kernel(tiles_per_slab,
                      h_ref,      # VMEM (P_pad, E)          bf16 (resident)
                      w2_ref,     # VMEM (E, tn)             bf16 (streamed, contiguous)
                      b2_ref,     # VMEM (n_total, 1, tn)    bf16 (resident)
                      out_ref):   # VMEM (P_pad, tn)         bf16
    t = pl.program_id(0) * tiles_per_slab + pl.program_id(1)
    y = jnp.dot(h_ref[...], w2_ref[...], preferred_element_type=jnp.float32)
    y = y + b2_ref[t].astype(jnp.float32)          # (1, tn) broadcast over rows
    out_ref[...] = y.astype(out_ref.dtype)


def prefix_mlp(emb_pad, w1, b1, w2_tiles, b2_tiles, *,
               n_slabs, tn, tiles_per_slab, vmem_limit_bytes=None):
    """Batch-independent prefix MLP.

    Returns pkv_slabs of shape (n_slabs, P_pad, n_embd), bf16, where slab 2l is
    the key slab of layer l and slab 2l+1 the value slab.
    """
    P_pad, E = emb_pad.shape
    n_total = w2_tiles.shape[0]                    # n_slabs * tiles_per_slab

    # ---- h = tanh(emb @ W1 + b1): W1 streamed in (E, tn1) tiles -------------
    tn1 = _pick_out_tile(E)
    h_bytes = (2 * P_pad * E + 2 * E * tn1 + 2 * tn1 + 2 * P_pad * tn1) * 2
    h_vmem = vmem_limit_bytes if vmem_limit_bytes else _vmem_limit(h_bytes)
    h_cost = pl.CostEstimate(
        flops=2 * P_pad * E * E,
        transcendentals=P_pad * E,
        bytes_accessed=(P_pad * E + E * E + E + P_pad * E) * 2)
    h = pl.pallas_call(
        _prefix_h_kernel,
        out_shape=jax.ShapeDtypeStruct((P_pad, E), jnp.bfloat16),
        grid=(E // tn1,),
        in_specs=[
            pl.BlockSpec((P_pad, E), lambda n: (0, 0)),    # emb: resident
            pl.BlockSpec((E, tn1), lambda n: (0, n)),      # W1 tile
            pl.BlockSpec((1, tn1), lambda n: (0, n)),      # b1 tile
        ],
        out_specs=pl.BlockSpec((P_pad, tn1), lambda n: (0, n)),
        compiler_params=pltpu.CompilerParams(
            dimension_semantics=("parallel",),
            vmem_limit_bytes=h_vmem),
        cost_estimate=h_cost,
    )(emb_pad, w1, b1)

    # ---- pkv slabs = h @ W2_slab + b2_slab (streamed contiguous W2 tiles) ---
    w2_bytes = (2 * P_pad * E        # resident h (count double-buffered)
                + 2 * E * tn         # W2 tile double buffer
                + 2 * n_total * tn   # resident b2
                + 2 * P_pad * tn     # out tile double buffer
                ) * 2
    w2_vmem = vmem_limit_bytes if vmem_limit_bytes else _vmem_limit(w2_bytes)
    w2_cost = pl.CostEstimate(
        flops=2 * P_pad * E * n_slabs * E,
        transcendentals=0,
        bytes_accessed=(P_pad * E + n_slabs * E * E + n_slabs * E
                        + n_slabs * P_pad * E) * 2)

    kernel = functools.partial(_prefix_w2_kernel, tiles_per_slab)
    pkv_slabs = pl.pallas_call(
        kernel,
        out_shape=jax.ShapeDtypeStruct((n_slabs, P_pad, E), jnp.bfloat16),
        grid=(n_slabs, tiles_per_slab),
        in_specs=[
            pl.BlockSpec((P_pad, E), lambda j, n: (0, 0)),            # h: resident
            pl.BlockSpec((None, E, tn),                               # W2 tile (contiguous)
                         lambda j, n: (j * tiles_per_slab + n, 0, 0)),
            pl.BlockSpec((n_total, 1, tn), lambda j, n: (0, 0, 0)),   # b2: resident
        ],
        out_specs=pl.BlockSpec((None, P_pad, tn), lambda j, n: (j, 0, n)),
        compiler_params=pltpu.CompilerParams(
            dimension_semantics=("parallel", "parallel"),
            vmem_limit_bytes=w2_vmem),
        cost_estimate=w2_cost,
    )(h, w2_tiles, b2_tiles)
    return pkv_slabs


# ----------------------------------------------------------------------------
# Module-level wrappers (plain-JAX glue around the kernels)
# ----------------------------------------------------------------------------
def init_prefix_tuning_params(key, match_n_layer, match_n_head, n_embd,
                              prefix_length):
    mid_dim = n_embd
    out_dim = match_n_layer * 2 * n_embd
    k0, k1, k2, k3, k4 = jax.random.split(key, 5)

    emb = (jax.random.normal(k0, (prefix_length, n_embd),
                             jnp.float32) * 0.02).astype(jnp.bfloat16)
    w1 = (jax.random.normal(k1, (n_embd, mid_dim),
                            jnp.float32) * 0.02).astype(jnp.bfloat16)
    b1 = (jax.random.normal(k2, (1, mid_dim),
                            jnp.float32) * 0.02).astype(jnp.bfloat16)
    w2 = (jax.random.normal(k3, (mid_dim, out_dim),
                            jnp.float32) * 0.02).astype(jnp.bfloat16)
    b2 = (jax.random.normal(k4, (1, out_dim),
                            jnp.float32) * 0.02).astype(jnp.bfloat16)

    n_slabs = 2 * match_n_layer
    P_pad = _pad_rows(prefix_length)

    # Pad prefix rows once at init (padded rows are sliced off after the kernel).
    emb_pad = jnp.zeros((P_pad, n_embd), jnp.bfloat16).at[:prefix_length].set(emb)

    # Pick the out-tile width once (generation-safe ~8 MiB W2 double-buffer
    # budget) and PRE-TILE W2/b2 so each streamed (E, tn) block is contiguous
    # in HBM. Slab j = columns [j*n_embd, (j+1)*n_embd) of the flat Linear.
    tn = _pick_out_tile(n_embd)
    tiles_per_slab = n_embd // tn
    w2_slabs = jnp.transpose(w2.reshape(mid_dim, n_slabs, n_embd), (1, 0, 2))
    w2_tiles = jnp.transpose(
        w2_slabs.reshape(n_slabs, mid_dim, tiles_per_slab, tn),
        (0, 2, 1, 3)).reshape(n_slabs * tiles_per_slab, mid_dim, tn)
    b2_tiles = b2.reshape(n_slabs * tiles_per_slab, 1, tn)

    params = {
        # input_tokens == arange(prefix_length): the embedding gather is an
        # identity, so the kernel consumes the (padded) table rows directly.
        "input_tokens": jnp.arange(prefix_length, dtype=jnp.int32),
        "emb": emb, "emb_pad": emb_pad, "w1": w1, "b1": b1,
        "w2": w2, "b2": b2,                 # flat (Linear) layout, for reference
        "w2_tiles": w2_tiles, "b2_tiles": b2_tiles,
    }
    meta = dict(match_n_layer=match_n_layer,
                match_n_head=match_n_head,
                match_n_embd=n_embd // match_n_head,
                n_embd=n_embd,
                prefix_length=prefix_length,
                prefix_length_padded=P_pad,
                out_tile=tn,
                tiles_per_slab=tiles_per_slab)
    return params, meta


def prefix_tuning_past_key_values(params, meta, bsz):
    """Equivalent of PrefixTuningPastKeyValues.forward(bsz).

    Returns a tuple of match_n_layer (key, value) pairs, each of shape
    (bsz, match_n_head, prefix_length, match_n_embd), bf16 — the legacy-cache
    layout fed to DynamicCache.from_legacy_cache.

    The result depends only on the parameters (not on the inputs), so under jit
    it is computed once per parameter set and the batch broadcast is lazy.
    """
    P = meta["prefix_length"]
    L = meta["match_n_layer"]
    H = meta["match_n_head"]
    D = meta["match_n_embd"]

    pkv = prefix_mlp(params["emb_pad"], params["w1"], params["b1"],
                     params["w2_tiles"], params["b2_tiles"],
                     n_slabs=2 * L,
                     tn=meta["out_tile"],
                     tiles_per_slab=meta["tiles_per_slab"])   # (2L, P_pad, E)

    pkv = pkv[:, :P, :]                                          # drop pad rows
    pkv = pkv.reshape(2 * L, P, H, D)
    # TODO(synk): when D >= 128 the (P,H,D)->(H,P,D) permute could be emitted
    # directly from the W2 kernel's out_spec; with small head_dim the lane-dense
    # (2L,P,E) store + this cheap XLA transpose is the faster layout.
    pkv = jnp.transpose(pkv, (0, 2, 1, 3))                       # (2L, H, P, D)
    pkv = jnp.broadcast_to(pkv[:, None], (2 * L, bsz, H, P, D))  # lazy batch bcast
    # TODO(synk): transformers.DynamicCache has no JAX equivalent; return the
    # legacy tuple-of-(key, value) structure instead.
    layers = tuple((pkv[2 * l], pkv[2 * l + 1]) for l in range(L))
    return layers


def prefix_tuning_model_forward(params, meta, inputs):
    """Equivalent of PrefixTuningModelPastKeyValues.forward up to the point of
    calling the frozen base model."""
    input_ids = inputs["input_ids"]
    bsz = input_ids.shape[0]
    tgt_attn = jnp.ones((bsz, meta["prefix_length"]),
                        dtype=inputs["attention_mask"].dtype)
    # Same order as the PyTorch spec: prefix mask appended AFTER the input mask.
    attention_mask = jnp.concatenate([inputs["attention_mask"], tgt_attn],
                                     axis=1)
    past_key_values = prefix_tuning_past_key_values(params, meta, bsz)
    # TODO(synk): the frozen base transformer `self.model(**inputs, labels=...,
    # past_key_values=...)` is an external model and is not reproduced here.
    return attention_mask, past_key_values


# ----------------------------------------------------------------------------
# Pure-JAX reference (mirrors the PyTorch forward) for a numeric sanity check
# Note: h is bf16-quantized between the two stages (matches the kernels).
# ----------------------------------------------------------------------------
def _reference_past_key_values(params, meta, bsz):
    P = meta["prefix_length"]
    L = meta["match_n_layer"]
    H = meta["match_n_head"]
    D = meta["match_n_embd"]
    E = meta["n_embd"]

    prefix = jnp.take(params["emb"], params["input_tokens"], axis=0)
    prefix = prefix.astype(jnp.float32)
    h = jnp.tanh(prefix @ params["w1"].astype(jnp.float32)
                 + params["b1"].astype(jnp.float32))
    h = h.astype(jnp.bfloat16).astype(jnp.float32)
    pkv = h @ params["w2"].astype(jnp.float32) + params["b2"].astype(jnp.float32)
    pkv = pkv.astype(jnp.bfloat16)
    pkv = jnp.broadcast_to(pkv[None], (bsz, P, 2 * L * E))
    pkv = pkv.reshape(bsz, P, 2 * L, H, D)
    pkv = jnp.transpose(pkv, (2, 0, 3, 1, 4))                   # (2L, b, H, P, D)
    return tuple((pkv[2 * l], pkv[2 * l + 1]) for l in range(L))


# ----------------------------------------------------------------------------
# Main
# ----------------------------------------------------------------------------
if __name__ == "__main__":
    # Small, module-consistent shapes.
    match_n_layer = 2
    match_n_head = 4
    n_embd = 32
    prefix_length = 8
    bsz = 2
    seq = 8

    key = jax.random.PRNGKey(0)
    pkey, dkey = jax.random.split(key)
    params, meta = init_prefix_tuning_params(
        pkey, match_n_layer, match_n_head, n_embd, prefix_length)

    inputs = {
        "input_ids": jax.random.randint(dkey, (bsz, seq), 0, 100, jnp.int32),
        "attention_mask": jnp.ones((bsz, seq), dtype=jnp.float32),
    }

    attention_mask, past_key_values = prefix_tuning_model_forward(
        params, meta, inputs)

    jax.block_until_ready(attention_mask)
    for k, v in past_key_values:
        jax.block_until_ready(k)
        jax.block_until_ready(v)

    # Shape/dtype checks.
    assert attention_mask.shape == (bsz, seq + prefix_length)
    assert len(past_key_values) == match_n_layer
    head_dim = n_embd // match_n_head
    for k, v in past_key_values:
        assert k.shape == (bsz, match_n_head, prefix_length, head_dim)
        assert v.shape == (bsz, match_n_head, prefix_length, head_dim)
        assert k.dtype == jnp.bfloat16 and v.dtype == jnp.bfloat16

    # Numeric check vs pure-JAX reference (bf16-level tolerance).
    ref = _reference_past_key_values(params, meta, bsz)
    for (k_p, v_p), (k_r, v_r) in zip(past_key_values, ref):
        assert jnp.allclose(k_p.astype(jnp.float32), k_r.astype(jnp.float32),
                            atol=1e-2, rtol=1e-1)
        assert jnp.allclose(v_p.astype(jnp.float32), v_r.astype(jnp.float32),
                            atol=1e-2, rtol=1e-1)

    print("KERNEL_OK")
</pallas_src>

<mosaic_0001>
module attributes {stable_mosaic.version = 11 : i64} {
  func.func @_prefix_h_kernel(%arg0: i32, %arg1: memref<16x32xbf16, #tpu.memory_space<vmem>>, %arg2: memref<32x32xbf16, #tpu.memory_space<vmem>>, %arg3: memref<1x32xbf16, #tpu.memory_space<vmem>>, %arg4: memref<16x32xbf16, #tpu.memory_space<vmem>>) attributes {dimension_semantics = [#tpu.dimension_semantics<parallel>], iteration_bounds = array<i64: 1>, scalar_prefetch = 0 : i64, scratch_operands = 0 : i64, tpu.core_type = #tpu.core_type<tc>, window_params = [{pipeline_mode = #tpu.pipeline_mode<synchronous>, transform_indices = @transform_0, window_bounds = array<i64: 16, 32>}, {transform_indices = @transform_1, window_bounds = array<i64: 32, 32>}, {transform_indices = @transform_2, window_bounds = array<i64: 1, 32>}, {transform_indices = @transform_3, window_bounds = array<i64: 16, 32>}]} {
    %c0 = arith.constant 0 : index
    %c0_0 = arith.constant 0 : index
    %0 = vector.load %arg1[%c0, %c0_0] : memref<16x32xbf16, #tpu.memory_space<vmem>>, vector<16x32xbf16>
    %c0_1 = arith.constant 0 : index
    %c0_2 = arith.constant 0 : index
    %1 = vector.load %arg2[%c0_1, %c0_2] : memref<32x32xbf16, #tpu.memory_space<vmem>>, vector<32x32xbf16>
    %cst = arith.constant dense<0.000000e+00> : vector<16x32xf32>
    %2 = tpu.matmul %0, %1, %cst {dimension_numbers = #tpu.dot_dimension_numbers<[1], [0], [0], [1], [0, 0, 1, 1], [], []>} : vector<16x32xbf16>, vector<32x32xbf16>, vector<16x32xf32> -> vector<16x32xf32>
    %c0_3 = arith.constant 0 : index
    %c0_4 = arith.constant 0 : index
    %3 = vector.load %arg3[%c0_3, %c0_4] : memref<1x32xbf16, #tpu.memory_space<vmem>>, vector<1x32xbf16>
    %4 = arith.extf %3 : vector<1x32xbf16> to vector<1x32xf32>
    %5 = vector.broadcast %4 : vector<1x32xf32> to vector<16x32xf32>
    %6 = arith.addf %2, %5 : vector<16x32xf32>
    %7 = math.tanh %6 : vector<16x32xf32>
    %8 = arith.truncf %7 : vector<16x32xf32> to vector<16x32xbf16>
    %c0_5 = arith.constant 0 : index
    %c0_6 = arith.constant 0 : index
    %9 = vector.load %arg4[%c0_5, %c0_6] : memref<16x32xbf16, #tpu.memory_space<vmem>>, vector<16x32xbf16>
    tpu.vector_store %arg4[%c0_5, %c0_6], %8 {strides = array<i32>} : memref<16x32xbf16, #tpu.memory_space<vmem>>, vector<16x32xbf16>,
    return
  }
  func.func @transform_0(%arg0: i32) -> (i32, i32) {
    %c0_i32 = arith.constant 0 : i32
    %c0_i32_0 = arith.constant 0 : i32
    %c0_i32_1 = arith.constant 0 : i32
    return %c0_i32, %c0_i32_0 : i32, i32
  }
  func.func @transform_1(%arg0: i32) -> (i32, i32) {
    %c0_i32 = arith.constant 0 : i32
    %c0_i32_0 = arith.constant 0 : i32
    return %c0_i32, %arg0 : i32, i32
  }
  func.func @transform_2(%arg0: i32) -> (i32, i32) {
    %c0_i32 = arith.constant 0 : i32
    %c0_i32_0 = arith.constant 0 : i32
    return %c0_i32, %arg0 : i32, i32
  }
  func.func @transform_3(%arg0: i32) -> (i32, i32) {
    %c0_i32 = arith.constant 0 : i32
    %c0_i32_0 = arith.constant 0 : i32
    return %c0_i32, %arg0 : i32, i32
  }
}

</mosaic_0001>

<llo_original>
// kernel: tpu_custom_call.1
$region0: #{tpu_custom_call.1}
  #allocation0 [shape = 'u32[]', space=smem, size = 0x4, offset = 0x4, fixed_abs, tag = 'smem constant byte address 0x4 - core index']
  #allocation1 [shape = 'u32[144,128]{1,0:T(1,128)}', space=vmem, size = 0x12000, scoped, tag = 'internal scratch']
  %s0 = inlined_call_operand.hbm [shape: bf16[16,32], index: 0, kind: input, shape index: {}]
  %s1 = inlined_call_operand.hbm [shape: bf16[32,32], index: 1, kind: input, shape index: {}]
  %s2 = inlined_call_operand.vmem [shape: bf16[1,32], index: 2, kind: input, shape index: {}]
  %s3 = inlined_call_operand.hbm [shape: bf16[16,32], index: 3, kind: output, shape index: {}]
  %s4 = sld [smem:[#allocation0]]
  $region30: #{tpu_custom_call.1} parent=0
    _
  %s6 = ssub.s32 1, %s4
  %s7 = scalar_select 0, %s6, %s4
  $region1: #{tpu_custom_call.1} parent=0
    #allocation2 [shape = 'u8[4096]{0}', space=vmem, size = 0x1000, scoped, tag = 'input window, operand 0, single buffered']
    #allocation3 [shape = 's32[1]{0}', space=sflag, size = 0x4, scoped, tag = 'scoped memory for tpu_custom_call.1']
    #allocation4 [shape = 's32[1]{0}', space=sflag, size = 0x4, scoped, tag = 'scoped memory for tpu_custom_call.1']
    #allocation5 [shape = 'u8[8192]{0}', space=vmem, size = 0x2000, scoped, tag = 'input window, operand 1, single buffered']
    #allocation6 [shape = 's32[1]{0}', space=sflag, size = 0x4, scoped, tag = 'scoped memory for tpu_custom_call.1']
    #allocation7 [shape = 'u8[4096]{0}', space=vmem, size = 0x1000, scoped, tag = 'output window, operand 0, single buffered']
    %8 = vsyncpa [#allocation3], 0
    %9 = vsyncpa [#allocation6], 0
    %10 = vsyncpa [#allocation4], 0
    // Predicated region
    $region2: #{tpu_custom_call.1} parent=1 // pred_check
      _
    $region3: #{tpu_custom_call.1} parent=1 // pred_check_branch
      %12 = sbr.rel (0) target = $region5
    $region4: #{tpu_custom_call.1} parent=1 // pred_region
      %s14 = ssub.s32 128, 128
      %15 = vsyncadd [#allocation3], %s14
      %s16 = sshll.u32 [#allocation2], 4
      %s17 = int_to_ptr.vmem [resolvable:$true] %s16
      %22 = dma.hbm_to_vmem [thread:$0]  %s0, 128, %s17, [#allocation3], 64, 64, 4
    $region5: #{tpu_custom_call.1} parent=1 // pred_fallthru
      _
    // Predicated region
    $region6: #{tpu_custom_call.1} parent=1 // pred_check
      _
    $region7: #{tpu_custom_call.1} parent=1 // pred_check_branch
      %24 = sbr.rel (0) target = $region9
    $region8: #{tpu_custom_call.1} parent=1 // pred_region
      %s26 = ssub.s32 256, 256
      %27 = vsyncadd [#allocation6], %s26
      %s28 = sshll.u32 [#allocation5], 4
      %s29 = int_to_ptr.vmem [resolvable:$true] %s28
      %34 = dma.hbm_to_vmem [thread:$0]  %s1, 256, %s29, [#allocation6], 64, 64, 4
    $region9: #{tpu_custom_call.1} parent=1 // pred_fallthru
      _
    // Predicated region
    $region10: #{tpu_custom_call.1} parent=1 // pred_check
      _
    $region11: #{tpu_custom_call.1} parent=1 // pred_check_branch
      %36 = sbr.rel (0) target = $region13
    $region12: #{tpu_custom_call.1} parent=1 // pred_region
      _
    $region13: #{tpu_custom_call.1} parent=1 // pred_fallthru
      _
    // Predicated region
    $region14: #{tpu_custom_call.1} parent=1 // pred_check
      _
    $region15: #{tpu_custom_call.1} parent=1 // pred_check_branch
      %38 = sbr.rel (0) target = $region17
    $region16: #{tpu_custom_call.1} parent=1 // pred_region
      %39 = dma.done [#allocation3], 128
    $region17: #{tpu_custom_call.1} parent=1 // pred_fallthru
      _
    // Predicated region
    $region18: #{tpu_custom_call.1} parent=1 // pred_check
      _
    $region19: #{tpu_custom_call.1} parent=1 // pred_check_branch
      %41 = sbr.rel (0) target = $region21
    $region20: #{tpu_custom_call.1} parent=1 // pred_region
      %42 = dma.done [#allocation6], 256
    $region21: #{tpu_custom_call.1} parent=1 // pred_fallthru
      _
    %v44 = vld [vmem:[#allocation2] sm:$0xf]
    %v45 = vld [vmem:[#allocation2 + $0x4] sm:$0xf]
    %v46 = vld [vmem:[#allocation5] sm:$0xf]
    %v47 = vld [vmem:[#allocation5 + $0x4] sm:$0xf]
    %v48 = vld [vmem:[#allocation5 + $0x8] sm:$0xf]
    %v49 = vld [vmem:[#allocation5 + $0xc] sm:$0xf]
    %v50 = vld [vmem:[%s2] sm:$0x1]
    %v51 = vunpack.c.l.bf16 %v50
    %v52 = vlaneseq
    %v53 = vshrl.u32 %v52, 7
    %v54 = vsub.s32 0, %v53
    %v55 = vrot.slane %v51, %v54
    %v58 = vunpack.c.l.b16 %v44
    %v59 = vunpack.c.l.b16 %v45
    %v60 = vpack.c.b16 %v59, %v58
    %v65 = vunpack.c.l.b16 %v46
    %v66 = vunpack.c.l.b16 %v47
    %v67 = vunpack.c.l.b16 %v48
    %v68 = vunpack.c.l.b16 %v49
    %v69 = vpack.c.b16 %v66, %v65
    %v70 = vpack.c.b16 %v68, %v67
    %vm73 = vcmask 261120
    %v75 = vsel %vm73, %v60, 0
    %77 = vmatprep.subr.bf16.mxu0 0
    %78 = vmatpush1.bf16.msra.mxu0 %v69
    %79 = vmatprep.subr.bf16.mxu0 0
    %80 = vmatpush1.bf16.msra.mxu0 %v70
    %81 = vmatprep.subr.bf16.mxu0 0
    %82 = vmatpush1.bf16.msra.mxu0 0
    %83 = vmatprep.subr.bf16.mxu0 0
    %84 = vmatpush1.bf16.msra.mxu0 0
    %85 = vmatprep.subr.bf16.mxu0 0
    %86 = vmatpush1.bf16.msra.mxu0 0
    %87 = vmatprep.subr.bf16.mxu0 0
    %88 = vmatpush1.bf16.msra.mxu0 0
    %89 = vmatprep.subr.bf16.mxu0 0
    %90 = vmatpush1.bf16.msra.mxu0 0
    %91 = vmatprep.subr.bf16.mxu0 0
    %92 = vmatpush1.bf16.msra.mxu0 0
    %93 = vmatprep.subr.bf16.mxu0 0
    %94 = vmatpush1.bf16.msra.mxu0 0
    %95 = vmatprep.subr.bf16.mxu0 0
    %96 = vmatpush1.bf16.msra.mxu0 0
    %97 = vmatprep.subr.bf16.mxu0 0
    %98 = vmatpush1.bf16.msra.mxu0 0
    %99 = vmatprep.subr.bf16.mxu0 0
    %100 = vmatpush1.bf16.msra.mxu0 0
    %101 = vmatprep.subr.bf16.mxu0 0
    %102 = vmatpush1.bf16.msra.mxu0 0
    %103 = vmatprep.subr.bf16.mxu0 0
    %104 = vmatpush1.bf16.msra.mxu0 0
    %105 = vmatprep.subr.bf16.mxu0 0
    %106 = vmatpush1.bf16.msra.mxu0 0
    %107 = vmatprep.subr.bf16.mxu0 0
    %108 = vmatpush1.bf16.msra.mxu0 0
    %109 = vmatprep.mubr.bf16.mxu0 0
    %110 = vmatmul.mubr.bf16.gmra.mrb[0].mxu0 %v75
    %v111 = vpop.f32.mrb[0].mxu0
    %v112 = vadd.f32 %v55, %v111
    %v113 = vpop.f32.mrb[0].mxu0
    %v114 = vpop.f32.mrb[0].mxu0
    %v115 = vadd.f32 %v55, %v114
    %v116 = vpop.f32.mrb[0].mxu0
    %117 = vdwg.mxu0
    %v118 = vtanh.pop %v112
    %v119 = vtanh.pop %v115
    %v120 = vpack.c.bf16 %v119, %v118
    %v122 = vunpack.c.l.b16 %v120
    %v123 = vunpack.c.h.b16 %v120
    %v124 = vpack.c.b16 %v122, %v122
    %v125 = vpack.c.b16 %v123, %v123
    %vm128 = vcmask 257024
    %129 = vst.msk [vmem:[#allocation7] sm:$0xf] %vm128, %v124
    %130 = vst.msk [vmem:[#allocation7 + $0x4] sm:$0xf] %vm128, %v125
    // Predicated region
    $region22: #{tpu_custom_call.1} parent=1 // pred_check
      _
    $region23: #{tpu_custom_call.1} parent=1 // pred_check_branch
      %132 = sbr.rel (0) target = $region25
    $region24: #{tpu_custom_call.1} parent=1 // pred_region
      %s134 = ssub.s32 128, 128
      %135 = vsyncadd [#allocation4], %s134
      %s136 = sshll.u32 [#allocation7], 4
      %s137 = int_to_ptr.vmem [resolvable:$true] %s136
      %142 = dma.vmem_to_hbm [thread:$0]  %s137, 128, %s3, [#allocation4], 64, 64, 4
    $region25: #{tpu_custom_call.1} parent=1 // pred_fallthru
      _
    // Predicated region
    $region26: #{tpu_custom_call.1} parent=1 // pred_check
      _
    $region27: #{tpu_custom_call.1} parent=1 // pred_check_branch
      %144 = sbr.rel (0) target = $region29
    $region28: #{tpu_custom_call.1} parent=1 // pred_region
      %145 = dma.done [#allocation4], 128
    $region29: #{tpu_custom_call.1} parent=1 // pred_fallthru
      _
    %146 = vsyncpa [#allocation3], 1
    %147 = vsyncpa [#allocation6], 1
    %148 = vsyncpa [#allocation4], 1

</llo_original>
